<compile_context>
chip_gen: v5e
topology: v5e:2x2
jax: 0.10.0
libtpu: 0.0.40
codegen_flags: <defaults>
</compile_context>

<pallas_src>
import functools

import jax
import jax.numpy as jnp
import numpy as np
from jax import lax
from jax.experimental import pallas as pl
from jax.experimental.pallas import tpu as pltpu

# ---- small, static problem sizes -------------------------------------------
B = 2            # batch
L = 16           # number of input tokens (e.g. 4x4 spatial, flattened)
M = 32           # input_size
O = 8            # number of slots
D = 32           # slot_size == qkv_size == head_dim (num_heads = 1)
NUM_ITER = 2     # slot-attention iterations
EPS = 1e-8       # slot-attention epsilon
LN_EPS = 1e-6    # LayerNorm epsilon (module uses eps=1e-6)
SCALE = 1.0 / float(np.sqrt(D))   # 1/sqrt(head_dim)

assert M == D, "packed small-vector tile assumes input_size == slot_size"

# Row layout of the packed (8, D) small-vector parameter tile.
#   0: ln_in_w   1: ln_in_b   2: ln_q_w   3: ln_q_b
#   4: b_r = b_ih_r + b_hh_r  5: b_z = b_ih_z + b_hh_z
#   6: b_ih_n                 7: b_hh_n
# wbig (M, 4D): [ SCALE * wk @ wq^T | wv @ w_ih_r | wv @ w_ih_z | wv @ w_ih_n ]
# whh  (D, 3D): [ w_hh_r | w_hh_z | w_hh_n ]


def slot_attention_kernel(
    slots_ref, inputs_ref,      # (bb*O, D), (bb*L, M)
    vecs_ref,                   # (8, D)    packed small vectors
    wbig_ref,                   # (M, 4D)   fused "q-projected K" | V@W_ih
    whh_ref,                    # (D, 3D)   fused GRU hidden weights
    out_ref,                    # (bb*O, D+L)  packed [slots | attn]
    *, bb,
):
    x = inputs_ref[...]        # (bb*L, M)
    slots = slots_ref[...]     # (bb*O, D)

    # --- unpack parameters (read once; kept as (1, D) rows, broadcast in adds)
    ln_in_w = vecs_ref[0:1, :]
    ln_in_b = vecs_ref[1:2, :]
    ln_q_w = vecs_ref[2:3, :]
    ln_q_b = vecs_ref[3:4, :]
    b_r = vecs_ref[4:5, :]
    b_z = vecs_ref[5:6, :]
    b_in = vecs_ref[6:7, :]
    b_hn = vecs_ref[7:8, :]
    whh = whh_ref[...]

    def layernorm(t, w, b):
        # var = E[x^2] - mu^2: the two lane reductions are independent.
        mu = jnp.mean(t, axis=-1, keepdims=True)
        ms = jnp.mean(t * t, axis=-1, keepdims=True)
        return (t - mu) * lax.rsqrt(ms - mu * mu + LN_EPS) * w + b

    # --- once per grid step: input LN + fused projection (lane-dense 128) ----
    xn = layernorm(x, ln_in_w, ln_in_b)                                 # (bb*L, M)
    kv = jnp.dot(xn, wbig_ref[...], preferred_element_type=jnp.float32)  # (bb*L, 4D)
    # Loop-invariant per-batch views: "q-projected" keys (already transposed)
    # and V @ W_ih.
    kt = [kv[b * L:(b + 1) * L, :D].T for b in range(bb)]               # (D, L)
    vih = [kv[b * L:(b + 1) * L, D:] for b in range(bb)]                # (L, 3D)

    attn_rows = [None] * bb
    for _ in range(NUM_ITER):   # static trip count -> unrolled
        slots_n = layernorm(slots, ln_q_w, ln_q_b)                      # (bb*O, D)
        gi_rows = []
        for b in range(bb):
            sn_b = slots_n[b * O:(b + 1) * O, :]
            # wq (and 1/sqrt(D)) are folded into kt -> logits in one matmul.
            logits = jnp.dot(sn_b, kt[b], preferred_element_type=jnp.float32)  # (O, L)
            # inverted attention: softmax over the slot (query) axis == axis 0
            mx = jnp.max(logits, axis=0, keepdims=True)
            e = jnp.exp(logits - mx)
            attn = e * pl.reciprocal(jnp.sum(e, axis=0, keepdims=True),
                                     approx=False)                       # (O, L)
            attn_rows[b] = attn
            # norm_type == 'mean': renormalize over keys
            attn_n = attn * pl.reciprocal(
                jnp.sum(attn, axis=-1, keepdims=True) + EPS, approx=False)
            # (attn_n @ v) @ W_ih == attn_n @ (v @ W_ih): one matmul, no `updates`.
            gi_rows.append(jnp.dot(attn_n, vih[b],
                                   preferred_element_type=jnp.float32))  # (O, 3D)
        gi = jnp.concatenate(gi_rows, axis=0) if bb > 1 else gi_rows[0]  # (bb*O, 3D)
        # GRU hidden projection: one fused matmul over the whole step's batch.
        gh = jnp.dot(slots, whh, preferred_element_type=jnp.float32)     # (bb*O, 3D)
        r = jax.nn.sigmoid(gi[:, :D] + gh[:, :D] + b_r)
        z = jax.nn.sigmoid(gi[:, D:2 * D] + gh[:, D:2 * D] + b_z)
        n = jnp.tanh(gi[:, 2 * D:] + b_in + r * (gh[:, 2 * D:] + b_hn))
        slots = (1.0 - z) * n + z * slots

    # packed output: lanes [0:D) = slots, [D:D+L) = attention (last iteration)
    out_ref[:, :D] = slots
    for b in range(bb):
        out_ref[b * O:(b + 1) * O, D:] = attn_rows[b]


def pack_params(p):
    """Pack the 11 parameter tensors into 3 DMA-friendly arrays (host-side)."""
    hi = jax.lax.Precision.HIGHEST
    vecs = jnp.concatenate([
        p["ln_in_w"], p["ln_in_b"], p["ln_q_w"], p["ln_q_b"],
        p["b_ih"][:, 0:D] + p["b_hh"][:, 0:D],          # b_r combined
        p["b_ih"][:, D:2 * D] + p["b_hh"][:, D:2 * D],  # b_z combined
        p["b_ih"][:, 2 * D:3 * D],                      # b_ih_n
        p["b_hh"][:, 2 * D:3 * D],                      # b_hh_n
    ], axis=0).astype(jnp.float32)                      # (8, D)
    # Fold dense_q (+ 1/sqrt(D)) into dense_k:
    #   (slots_n @ SCALE*wq) @ (xn @ wk)^T == slots_n @ (xn @ (SCALE * wk @ wq^T))^T
    wkq = SCALE * jnp.dot(p["wk"], p["wq"].T, precision=hi)              # (M, D)
    # Fold dense_v into the GRU input projection:
    #   (attn_n @ (xn @ wv)) @ w_ih == attn_n @ (xn @ (wv @ w_ih))
    wvih = jnp.dot(p["wv"], p["w_ih"], precision=hi)                     # (M, 3D)
    wbig = jnp.concatenate([wkq, wvih], axis=-1).astype(jnp.float32)     # (M, 4D)
    whh = p["w_hh"].astype(jnp.float32)                                  # (D, 3D)
    return vecs, wbig, whh


def _default_batch_per_step():
    """bb = B on single-TC chips (v5e/v6e); bb = 1 elsewhere (v7x 2-TC,
    v4/v5p megacore) so dimension_semantics=("parallel",) uses every core."""
    try:
        kind = jax.devices()[0].device_kind.lower()
    except Exception:
        return 1
    single_tc = any(tag in kind
                    for tag in ("v5 lite", "v5e", "v5lite", "v6 lite", "v6e", "v6lite"))
    return B if single_tc else 1


def slot_attention(slots, inputs, packed, *, batch_per_step=None):
    vecs, wbig, whh = packed
    bb = batch_per_step if batch_per_step is not None else _default_batch_per_step()
    assert B % bb == 0
    steps = B // bb
    # Fold batch into the sublane axis on the host (free XLA reshapes), so the
    # kernel never reshapes leading dims.
    slots2 = slots.reshape(B * O, D)
    inputs2 = inputs.reshape(B * L, M)

    in_specs = [
        pl.BlockSpec((bb * O, D), lambda i: (i, 0)),         # slots
        pl.BlockSpec((bb * L, M), lambda i: (i, 0)),         # inputs
        pl.BlockSpec((8, D), lambda i: (0, 0)),              # packed small vectors
        pl.BlockSpec((M, 4 * D), lambda i: (0, 0)),          # fused [wkq | wv@w_ih]
        pl.BlockSpec((D, 3 * D), lambda i: (0, 0)),          # fused GRU hidden weights
    ]
    out_specs = pl.BlockSpec((bb * O, D + L), lambda i: (i, 0))
    out_shape = jax.ShapeDtypeStruct((B * O, D + L), jnp.float32)

    out = pl.pallas_call(
        functools.partial(slot_attention_kernel, bb=bb),
        out_shape=out_shape,
        grid_spec=pltpu.PrefetchScalarGridSpec(
            num_scalar_prefetch=0,
            grid=(steps,),
            in_specs=in_specs,
            out_specs=out_specs,
        ),
        compiler_params=pltpu.CompilerParams(
            dimension_semantics=("parallel",)),   # batch across cores on v7x
    )(slots2, inputs2, vecs, wbig, whh)

    out = out.reshape(B, O, D + L)
    slots_out = out[..., :D]                       # (B, O, D)
    attn_out = out[..., D:].reshape(B, 1, O, L)    # (B, 1, O, L)
    return slots_out, attn_out


# ---- pure-JAX reference (same math as the torch module, batched) ------------
def reference(slots, inputs, p):
    prec = jax.lax.Precision.HIGHEST

    def ln(x, w, b):
        mu = x.mean(-1, keepdims=True)
        var = ((x - mu) ** 2).mean(-1, keepdims=True)
        return (x - mu) / jnp.sqrt(var + LN_EPS) * w + b

    xn = ln(inputs, p["ln_in_w"], p["ln_in_b"])
    k = jnp.einsum("blm,md->bld", xn, p["wk"], precision=prec)
    v = jnp.einsum("blm,md->bld", xn, p["wv"], precision=prec)
    attn = None
    for _ in range(NUM_ITER):
        sn = ln(slots, p["ln_q_w"], p["ln_q_b"])
        q = jnp.einsum("bod,de->boe", sn, p["wq"], precision=prec) * SCALE
        logits = jnp.einsum("bod,bld->bol", q, k, precision=prec)      # (B, O, L)
        attn = jax.nn.softmax(logits, axis=-2)                          # softmax over slots
        attn_n = attn / (attn.sum(-1, keepdims=True) + EPS)
        updates = jnp.einsum("bol,bld->bod", attn_n, v, precision=prec)
        gi = jnp.einsum("bod,de->boe", updates, p["w_ih"], precision=prec) + p["b_ih"]
        gh = jnp.einsum("bod,de->boe", slots, p["w_hh"], precision=prec) + p["b_hh"]
        r = jax.nn.sigmoid(gi[..., :D] + gh[..., :D])
        z = jax.nn.sigmoid(gi[..., D:2 * D] + gh[..., D:2 * D])
        n = jnp.tanh(gi[..., 2 * D:] + r * gh[..., 2 * D:])
        slots = (1.0 - z) * n + z * slots
    return slots, attn[:, None, :, :]


if __name__ == "__main__":
    key = jax.random.PRNGKey(0)
    ks = jax.random.split(key, 16)

    def xavier(k, shape):
        lim = float(np.sqrt(6.0 / (shape[0] + shape[1])))
        return jax.random.uniform(k, shape, jnp.float32, -lim, lim)

    def gru_uniform(k, shape):
        lim = 1.0 / float(np.sqrt(D))
        return jax.random.uniform(k, shape, jnp.float32, -lim, lim)

    slots = jax.random.normal(ks[0], (B, O, D), jnp.float32)
    inputs = jax.random.normal(ks[1], (B, L, M), jnp.float32)

    p = {
        "ln_in_w": 1.0 + 0.1 * jax.random.normal(ks[2], (1, M), jnp.float32),
        "ln_in_b": 0.1 * jax.random.normal(ks[3], (1, M), jnp.float32),
        "ln_q_w": 1.0 + 0.1 * jax.random.normal(ks[4], (1, D), jnp.float32),
        "ln_q_b": 0.1 * jax.random.normal(ks[5], (1, D), jnp.float32),
        "wq": xavier(ks[6], (D, D)),
        "wk": xavier(ks[7], (M, D)),
        "wv": xavier(ks[8], (M, D)),
        "w_ih": gru_uniform(ks[9], (D, 3 * D)),
        "w_hh": gru_uniform(ks[10], (D, 3 * D)),
        "b_ih": gru_uniform(ks[11], (1, 3 * D)),
        "b_hh": gru_uniform(ks[12], (1, 3 * D)),
    }

    packed = pack_params(p)

    out_slots, out_attn = slot_attention(slots, inputs, packed)
    jax.block_until_ready((out_slots, out_attn))

    ref_slots, ref_attn = reference(slots, inputs, p)
    np.testing.assert_allclose(np.asarray(out_slots), np.asarray(ref_slots),
                               rtol=2e-3, atol=2e-3)
    np.testing.assert_allclose(np.asarray(out_attn), np.asarray(ref_attn),
                               rtol=2e-3, atol=2e-3)
    print("KERNEL_OK")
</pallas_src>

<mosaic_0001>
module attributes {stable_mosaic.version = 11 : i64} {
  func.func @slot_attention_kernel(%arg0: i32, %arg1: memref<8x32xf32, #tpu.memory_space<vmem>>, %arg2: memref<16x32xf32, #tpu.memory_space<vmem>>, %arg3: memref<8x32xf32, #tpu.memory_space<vmem>>, %arg4: memref<32x128xf32, #tpu.memory_space<vmem>>, %arg5: memref<32x96xf32, #tpu.memory_space<vmem>>, %arg6: memref<8x48xf32, #tpu.memory_space<vmem>>) attributes {dimension_semantics = [#tpu.dimension_semantics<parallel>], iteration_bounds = array<i64: 2>, scalar_prefetch = 0 : i64, scratch_operands = 0 : i64, tpu.core_type = #tpu.core_type<tc>, window_params = [{transform_indices = @transform_0, window_bounds = array<i64: 8, 32>}, {transform_indices = @transform_1, window_bounds = array<i64: 16, 32>}, {pipeline_mode = #tpu.pipeline_mode<synchronous>, transform_indices = @transform_2, window_bounds = array<i64: 8, 32>}, {pipeline_mode = #tpu.pipeline_mode<synchronous>, transform_indices = @transform_3, window_bounds = array<i64: 32, 128>}, {pipeline_mode = #tpu.pipeline_mode<synchronous>, transform_indices = @transform_4, window_bounds = array<i64: 32, 96>}, {transform_indices = @transform_5, window_bounds = array<i64: 8, 48>}]} {
    %c0 = arith.constant 0 : index
    %c0_0 = arith.constant 0 : index
    %0 = vector.load %arg2[%c0, %c0_0] : memref<16x32xf32, #tpu.memory_space<vmem>>, vector<16x32xf32>
    %c0_1 = arith.constant 0 : index
    %c0_2 = arith.constant 0 : index
    %1 = vector.load %arg1[%c0_1, %c0_2] : memref<8x32xf32, #tpu.memory_space<vmem>>, vector<8x32xf32>
    %c0_3 = arith.constant 0 : index
    %c0_4 = arith.constant 0 : index
    %2 = vector.load %arg3[%c0_3, %c0_4] : memref<8x32xf32, #tpu.memory_space<vmem>>, vector<1x32xf32>
    %c1 = arith.constant 1 : index
    %c0_5 = arith.constant 0 : index
    %3 = vector.load %arg3[%c1, %c0_5] : memref<8x32xf32, #tpu.memory_space<vmem>>, vector<1x32xf32>
    %c2 = arith.constant 2 : index
    %c0_6 = arith.constant 0 : index
    %4 = vector.load %arg3[%c2, %c0_6] : memref<8x32xf32, #tpu.memory_space<vmem>>, vector<1x32xf32>
    %c3 = arith.constant 3 : index
    %c0_7 = arith.constant 0 : index
    %5 = vector.load %arg3[%c3, %c0_7] : memref<8x32xf32, #tpu.memory_space<vmem>>, vector<1x32xf32>
    %c4 = arith.constant 4 : index
    %c0_8 = arith.constant 0 : index
    %6 = vector.load %arg3[%c4, %c0_8] : memref<8x32xf32, #tpu.memory_space<vmem>>, vector<1x32xf32>
    %c5 = arith.constant 5 : index
    %c0_9 = arith.constant 0 : index
    %7 = vector.load %arg3[%c5, %c0_9] : memref<8x32xf32, #tpu.memory_space<vmem>>, vector<1x32xf32>
    %c6 = arith.constant 6 : index
    %c0_10 = arith.constant 0 : index
    %8 = vector.load %arg3[%c6, %c0_10] : memref<8x32xf32, #tpu.memory_space<vmem>>, vector<1x32xf32>
    %c7 = arith.constant 7 : index
    %c0_11 = arith.constant 0 : index
    %9 = vector.load %arg3[%c7, %c0_11] : memref<8x32xf32, #tpu.memory_space<vmem>>, vector<1x32xf32>
    %c0_12 = arith.constant 0 : index
    %c0_13 = arith.constant 0 : index
    %10 = vector.load %arg5[%c0_12, %c0_13] : memref<32x96xf32, #tpu.memory_space<vmem>>, vector<32x96xf32>
    %cst = arith.constant dense<0.000000e+00> : vector<16xf32>
    %11 = vector.multi_reduction <add>, %0, %cst [1] : vector<16x32xf32> to vector<16xf32>
    %12 = vector.shape_cast %11 : vector<16xf32> to vector<16x1xf32>
    %cst_14 = arith.constant 3.200000e+01 : f32
    %13 = vector.broadcast %cst_14 : f32 to vector<16x1xf32>
    %14 = arith.divf %12, %13 : vector<16x1xf32>
    %15 = arith.mulf %0, %0 : vector<16x32xf32>
    %cst_15 = arith.constant dense<0.000000e+00> : vector<16xf32>
    %16 = vector.multi_reduction <add>, %15, %cst_15 [1] : vector<16x32xf32> to vector<16xf32>
    %17 = vector.shape_cast %16 : vector<16xf32> to vector<16x1xf32>
    %cst_16 = arith.constant 3.200000e+01 : f32
    %18 = vector.broadcast %cst_16 : f32 to vector<16x1xf32>
    %19 = arith.divf %17, %18 : vector<16x1xf32>
    %20 = vector.broadcast %14 : vector<16x1xf32> to vector<16x32xf32>
    %21 = arith.subf %0, %20 : vector<16x32xf32>
    %22 = arith.mulf %14, %14 : vector<16x1xf32>
    %23 = arith.subf %19, %22 : vector<16x1xf32>
    %cst_17 = arith.constant 9.99999997E-7 : f32
    %24 = vector.broadcast %cst_17 : f32 to vector<16x1xf32>
    %25 = arith.addf %23, %24 : vector<16x1xf32>
    %26 = math.rsqrt %25 : vector<16x1xf32>
    %27 = vector.broadcast %26 : vector<16x1xf32> to vector<16x32xf32>
    %28 = arith.mulf %21, %27 : vector<16x32xf32>
    %29 = vector.broadcast %2 : vector<1x32xf32> to vector<16x32xf32>
    %30 = arith.mulf %28, %29 : vector<16x32xf32>
    %31 = vector.broadcast %3 : vector<1x32xf32> to vector<16x32xf32>
    %32 = arith.addf %30, %31 : vector<16x32xf32>
    %c0_18 = arith.constant 0 : index
    %c0_19 = arith.constant 0 : index
    %33 = vector.load %arg4[%c0_18, %c0_19] : memref<32x128xf32, #tpu.memory_space<vmem>>, vector<32x128xf32>
    %cst_20 = arith.constant dense<0.000000e+00> : vector<16x128xf32>
    %34 = tpu.matmul %32, %33, %cst_20 {dimension_numbers = #tpu.dot_dimension_numbers<[1], [0], [0], [1], [0, 0, 1, 1], [], []>} : vector<16x32xf32>, vector<32x128xf32>, vector<16x128xf32> -> vector<16x128xf32>
    %35 = vector.extract_strided_slice %34 {offsets = [0, 0], sizes = [16, 32], strides = [1, 1]} : vector<16x128xf32> to vector<16x32xf32>
    %36 = tpu.transpose %35, [1, 0] : vector<16x32xf32> -> vector<32x16xf32>
    %37 = vector.extract_strided_slice %34 {offsets = [0, 32], sizes = [16, 96], strides = [1, 1]} : vector<16x128xf32> to vector<16x96xf32>
    %cst_21 = arith.constant dense<0.000000e+00> : vector<8xf32>
    %38 = vector.multi_reduction <add>, %1, %cst_21 [1] : vector<8x32xf32> to vector<8xf32>
    %39 = vector.shape_cast %38 : vector<8xf32> to vector<8x1xf32>
    %cst_22 = arith.constant 3.200000e+01 : f32
    %40 = vector.broadcast %cst_22 : f32 to vector<8x1xf32>
    %41 = arith.divf %39, %40 : vector<8x1xf32>
    %42 = arith.mulf %1, %1 : vector<8x32xf32>
    %cst_23 = arith.constant dense<0.000000e+00> : vector<8xf32>
    %43 = vector.multi_reduction <add>, %42, %cst_23 [1] : vector<8x32xf32> to vector<8xf32>
    %44 = vector.shape_cast %43 : vector<8xf32> to vector<8x1xf32>
    %cst_24 = arith.constant 3.200000e+01 : f32
    %45 = vector.broadcast %cst_24 : f32 to vector<8x1xf32>
    %46 = arith.divf %44, %45 : vector<8x1xf32>
    %47 = vector.broadcast %41 : vector<8x1xf32> to vector<8x32xf32>
    %48 = arith.subf %1, %47 : vector<8x32xf32>
    %49 = arith.mulf %41, %41 : vector<8x1xf32>
    %50 = arith.subf %46, %49 : vector<8x1xf32>
    %cst_25 = arith.constant 9.99999997E-7 : f32
    %51 = vector.broadcast %cst_25 : f32 to vector<8x1xf32>
    %52 = arith.addf %50, %51 : vector<8x1xf32>
    %53 = math.rsqrt %52 : vector<8x1xf32>
    %54 = vector.broadcast %53 : vector<8x1xf32> to vector<8x32xf32>
    %55 = arith.mulf %48, %54 : vector<8x32xf32>
    %56 = vector.broadcast %4 : vector<1x32xf32> to vector<8x32xf32>
    %57 = arith.mulf %55, %56 : vector<8x32xf32>
    %58 = vector.broadcast %5 : vector<1x32xf32> to vector<8x32xf32>
    %59 = arith.addf %57, %58 : vector<8x32xf32>
    %cst_26 = arith.constant dense<0.000000e+00> : vector<8x16xf32>
    %60 = tpu.matmul %59, %36, %cst_26 {dimension_numbers = #tpu.dot_dimension_numbers<[1], [0], [0], [1], [0, 0, 1, 1], [], []>} : vector<8x32xf32>, vector<32x16xf32>, vector<8x16xf32> -> vector<8x16xf32>
    %cst_27 = arith.constant dense<0xFF800000> : vector<16xf32>
    %61 = vector.multi_reduction <maximumf>, %60, %cst_27 [0] : vector<8x16xf32> to vector<16xf32>
    %62 = vector.shape_cast %61 : vector<16xf32> to vector<1x16xf32>
    %63 = vector.broadcast %62 : vector<1x16xf32> to vector<8x16xf32>
    %64 = arith.subf %60, %63 : vector<8x16xf32>
    %65 = math.exp %64 : vector<8x16xf32>
    %cst_28 = arith.constant dense<0.000000e+00> : vector<16xf32>
    %66 = vector.multi_reduction <add>, %65, %cst_28 [0] : vector<8x16xf32> to vector<16xf32>
    %67 = vector.shape_cast %66 : vector<16xf32> to vector<1x16xf32>
    %68 = tpu.reciprocal %67 : vector<1x16xf32> -> vector<1x16xf32>
    %69 = vector.broadcast %68 : vector<1x16xf32> to vector<8x16xf32>
    %70 = arith.mulf %65, %69 : vector<8x16xf32>
    %cst_29 = arith.constant dense<0.000000e+00> : vector<8xf32>
    %71 = vector.multi_reduction <add>, %70, %cst_29 [1] : vector<8x16xf32> to vector<8xf32>
    %72 = vector.shape_cast %71 : vector<8xf32> to vector<8x1xf32>
    %cst_30 = arith.constant 9.99999993E-9 : f32
    %73 = vector.broadcast %cst_30 : f32 to vector<8x1xf32>
    %74 = arith.addf %72, %73 : vector<8x1xf32>
    %75 = tpu.reciprocal %74 : vector<8x1xf32> -> vector<8x1xf32>
    %76 = vector.broadcast %75 : vector<8x1xf32> to vector<8x16xf32>
    %77 = arith.mulf %70, %76 : vector<8x16xf32>
    %cst_31 = arith.constant dense<0.000000e+00> : vector<8x96xf32>
    %78 = tpu.matmul %77, %37, %cst_31 {dimension_numbers = #tpu.dot_dimension_numbers<[1], [0], [0], [1], [0, 0, 1, 1], [], []>} : vector<8x16xf32>, vector<16x96xf32>, vector<8x96xf32> -> vector<8x96xf32>
    %cst_32 = arith.constant dense<0.000000e+00> : vector<8x96xf32>
    %79 = tpu.matmul %1, %10, %cst_32 {dimension_numbers = #tpu.dot_dimension_numbers<[1], [0], [0], [1], [0, 0, 1, 1], [], []>} : vector<8x32xf32>, vector<32x96xf32>, vector<8x96xf32> -> vector<8x96xf32>
    %80 = vector.extract_strided_slice %78 {offsets = [0, 0], sizes = [8, 32], strides = [1, 1]} : vector<8x96xf32> to vector<8x32xf32>
    %81 = vector.extract_strided_slice %79 {offsets = [0, 0], sizes = [8, 32], strides = [1, 1]} : vector<8x96xf32> to vector<8x32xf32>
    %82 = arith.addf %80, %81 : vector<8x32xf32>
    %83 = vector.broadcast %6 : vector<1x32xf32> to vector<8x32xf32>
    %84 = arith.addf %82, %83 : vector<8x32xf32>
    %85 = arith.negf %84 : vector<8x32xf32>
    %86 = math.exp %85 : vector<8x32xf32>
    %cst_33 = arith.constant 1.000000e+00 : f32
    %87 = vector.broadcast %cst_33 : f32 to vector<8x32xf32>
    %88 = arith.addf %87, %86 : vector<8x32xf32>
    %89 = arith.divf %87, %88 : vector<8x32xf32>
    %90 = vector.extract_strided_slice %78 {offsets = [0, 32], sizes = [8, 32], strides = [1, 1]} : vector<8x96xf32> to vector<8x32xf32>
    %91 = vector.extract_strided_slice %79 {offsets = [0, 32], sizes = [8, 32], strides = [1, 1]} : vector<8x96xf32> to vector<8x32xf32>
    %92 = arith.addf %90, %91 : vector<8x32xf32>
    %93 = vector.broadcast %7 : vector<1x32xf32> to vector<8x32xf32>
    %94 = arith.addf %92, %93 : vector<8x32xf32>
    %95 = arith.negf %94 : vector<8x32xf32>
    %96 = math.exp %95 : vector<8x32xf32>
    %cst_34 = arith.constant 1.000000e+00 : f32
    %97 = vector.broadcast %cst_34 : f32 to vector<8x32xf32>
    %98 = arith.addf %97, %96 : vector<8x32xf32>
    %99 = arith.divf %97, %98 : vector<8x32xf32>
    %100 = vector.extract_strided_slice %78 {offsets = [0, 64], sizes = [8, 32], strides = [1, 1]} : vector<8x96xf32> to vector<8x32xf32>
    %101 = vector.broadcast %8 : vector<1x32xf32> to vector<8x32xf32>
    %102 = arith.addf %100, %101 : vector<8x32xf32>
    %103 = vector.extract_strided_slice %79 {offsets = [0, 64], sizes = [8, 32], strides = [1, 1]} : vector<8x96xf32> to vector<8x32xf32>
    %104 = vector.broadcast %9 : vector<1x32xf32> to vector<8x32xf32>
    %105 = arith.addf %103, %104 : vector<8x32xf32>
    %106 = arith.mulf %89, %105 : vector<8x32xf32>
    %107 = arith.addf %102, %106 : vector<8x32xf32>
    %108 = math.tanh %107 : vector<8x32xf32>
    %cst_35 = arith.constant 1.000000e+00 : f32
    %109 = vector.broadcast %cst_35 : f32 to vector<8x32xf32>
    %110 = arith.subf %109, %99 : vector<8x32xf32>
    %111 = arith.mulf %110, %108 : vector<8x32xf32>
    %112 = arith.mulf %99, %1 : vector<8x32xf32>
    %113 = arith.addf %111, %112 : vector<8x32xf32>
    %cst_36 = arith.constant dense<0.000000e+00> : vector<8xf32>
    %114 = vector.multi_reduction <add>, %113, %cst_36 [1] : vector<8x32xf32> to vector<8xf32>
    %115 = vector.shape_cast %114 : vector<8xf32> to vector<8x1xf32>
    %cst_37 = arith.constant 3.200000e+01 : f32
    %116 = vector.broadcast %cst_37 : f32 to vector<8x1xf32>
    %117 = arith.divf %115, %116 : vector<8x1xf32>
    %118 = arith.mulf %113, %113 : vector<8x32xf32>
    %cst_38 = arith.constant dense<0.000000e+00> : vector<8xf32>
    %119 = vector.multi_reduction <add>, %118, %cst_38 [1] : vector<8x32xf32> to vector<8xf32>
    %120 = vector.shape_cast %119 : vector<8xf32> to vector<8x1xf32>
    %cst_39 = arith.constant 3.200000e+01 : f32
    %121 = vector.broadcast %cst_39 : f32 to vector<8x1xf32>
    %122 = arith.divf %120, %121 : vector<8x1xf32>
    %123 = vector.broadcast %117 : vector<8x1xf32> to vector<8x32xf32>
    %124 = arith.subf %113, %123 : vector<8x32xf32>
    %125 = arith.mulf %117, %117 : vector<8x1xf32>
    %126 = arith.subf %122, %125 : vector<8x1xf32>
    %cst_40 = arith.constant 9.99999997E-7 : f32
    %127 = vector.broadcast %cst_40 : f32 to vector<8x1xf32>
    %128 = arith.addf %126, %127 : vector<8x1xf32>
    %129 = math.rsqrt %128 : vector<8x1xf32>
    %130 = vector.broadcast %129 : vector<8x1xf32> to vector<8x32xf32>
    %131 = arith.mulf %124, %130 : vector<8x32xf32>
    %132 = vector.broadcast %4 : vector<1x32xf32> to vector<8x32xf32>
    %133 = arith.mulf %131, %132 : vector<8x32xf32>
    %134 = vector.broadcast %5 : vector<1x32xf32> to vector<8x32xf32>
    %135 = arith.addf %133, %134 : vector<8x32xf32>
    %cst_41 = arith.constant dense<0.000000e+00> : vector<8x16xf32>
    %136 = tpu.matmul %135, %36, %cst_41 {dimension_numbers = #tpu.dot_dimension_numbers<[1], [0], [0], [1], [0, 0, 1, 1], [], []>} : vector<8x32xf32>, vector<32x16xf32>, vector<8x16xf32> -> vector<8x16xf32>
    %cst_42 = arith.constant dense<0xFF800000> : vector<16xf32>
    %137 = vector.multi_reduction <maximumf>, %136, %cst_42 [0] : vector<8x16xf32> to vector<16xf32>
    %138 = vector.shape_cast %137 : vector<16xf32> to vector<1x16xf32>
    %139 = vector.broadcast %138 : vector<1x16xf32> to vector<8x16xf32>
    %140 = arith.subf %136, %139 : vector<8x16xf32>
    %141 = math.exp %140 : vector<8x16xf32>
    %cst_43 = arith.constant dense<0.000000e+00> : vector<16xf32>
    %142 = vector.multi_reduction <add>, %141, %cst_43 [0] : vector<8x16xf32> to vector<16xf32>
    %143 = vector.shape_cast %142 : vector<16xf32> to vector<1x16xf32>
    %144 = tpu.reciprocal %143 : vector<1x16xf32> -> vector<1x16xf32>
    %145 = vector.broadcast %144 : vector<1x16xf32> to vector<8x16xf32>
    %146 = arith.mulf %141, %145 : vector<8x16xf32>
    %cst_44 = arith.constant dense<0.000000e+00> : vector<8xf32>
    %147 = vector.multi_reduction <add>, %146, %cst_44 [1] : vector<8x16xf32> to vector<8xf32>
    %148 = vector.shape_cast %147 : vector<8xf32> to vector<8x1xf32>
    %cst_45 = arith.constant 9.99999993E-9 : f32
    %149 = vector.broadcast %cst_45 : f32 to vector<8x1xf32>
    %150 = arith.addf %148, %149 : vector<8x1xf32>
    %151 = tpu.reciprocal %150 : vector<8x1xf32> -> vector<8x1xf32>
    %152 = vector.broadcast %151 : vector<8x1xf32> to vector<8x16xf32>
    %153 = arith.mulf %146, %152 : vector<8x16xf32>
    %cst_46 = arith.constant dense<0.000000e+00> : vector<8x96xf32>
    %154 = tpu.matmul %153, %37, %cst_46 {dimension_numbers = #tpu.dot_dimension_numbers<[1], [0], [0], [1], [0, 0, 1, 1], [], []>} : vector<8x16xf32>, vector<16x96xf32>, vector<8x96xf32> -> vector<8x96xf32>
    %cst_47 = arith.constant dense<0.000000e+00> : vector<8x96xf32>
    %155 = tpu.matmul %113, %10, %cst_47 {dimension_numbers = #tpu.dot_dimension_numbers<[1], [0], [0], [1], [0, 0, 1, 1], [], []>} : vector<8x32xf32>, vector<32x96xf32>, vector<8x96xf32> -> vector<8x96xf32>
    %156 = vector.extract_strided_slice %154 {offsets = [0, 0], sizes = [8, 32], strides = [1, 1]} : vector<8x96xf32> to vector<8x32xf32>
    %157 = vector.extract_strided_slice %155 {offsets = [0, 0], sizes = [8, 32], strides = [1, 1]} : vector<8x96xf32> to vector<8x32xf32>
    %158 = arith.addf %156, %157 : vector<8x32xf32>
    %159 = vector.broadcast %6 : vector<1x32xf32> to vector<8x32xf32>
    %160 = arith.addf %158, %159 : vector<8x32xf32>
    %161 = arith.negf %160 : vector<8x32xf32>
    %162 = math.exp %161 : vector<8x32xf32>
    %cst_48 = arith.constant 1.000000e+00 : f32
    %163 = vector.broadcast %cst_48 : f32 to vector<8x32xf32>
    %164 = arith.addf %163, %162 : vector<8x32xf32>
    %165 = arith.divf %163, %164 : vector<8x32xf32>
    %166 = vector.extract_strided_slice %154 {offsets = [0, 32], sizes = [8, 32], strides = [1, 1]} : vector<8x96xf32> to vector<8x32xf32>
    %167 = vector.extract_strided_slice %155 {offsets = [0, 32], sizes = [8, 32], strides = [1, 1]} : vector<8x96xf32> to vector<8x32xf32>
    %168 = arith.addf %166, %167 : vector<8x32xf32>
    %169 = vector.broadcast %7 : vector<1x32xf32> to vector<8x32xf32>
    %170 = arith.addf %168, %169 : vector<8x32xf32>
    %171 = arith.negf %170 : vector<8x32xf32>
    %172 = math.exp %171 : vector<8x32xf32>
    %cst_49 = arith.constant 1.000000e+00 : f32
    %173 = vector.broadcast %cst_49 : f32 to vector<8x32xf32>
    %174 = arith.addf %173, %172 : vector<8x32xf32>
    %175 = arith.divf %173, %174 : vector<8x32xf32>
    %176 = vector.extract_strided_slice %154 {offsets = [0, 64], sizes = [8, 32], strides = [1, 1]} : vector<8x96xf32> to vector<8x32xf32>
    %177 = vector.broadcast %8 : vector<1x32xf32> to vector<8x32xf32>
    %178 = arith.addf %176, %177 : vector<8x32xf32>
    %179 = vector.extract_strided_slice %155 {offsets = [0, 64], sizes = [8, 32], strides = [1, 1]} : vector<8x96xf32> to vector<8x32xf32>
    %180 = vector.broadcast %9 : vector<1x32xf32> to vector<8x32xf32>
    %181 = arith.addf %179, %180 : vector<8x32xf32>
    %182 = arith.mulf %165, %181 : vector<8x32xf32>
    %183 = arith.addf %178, %182 : vector<8x32xf32>
    %184 = math.tanh %183 : vector<8x32xf32>
    %cst_50 = arith.constant 1.000000e+00 : f32
    %185 = vector.broadcast %cst_50 : f32 to vector<8x32xf32>
    %186 = arith.subf %185, %175 : vector<8x32xf32>
    %187 = arith.mulf %186, %184 : vector<8x32xf32>
    %188 = arith.mulf %175, %113 : vector<8x32xf32>
    %189 = arith.addf %187, %188 : vector<8x32xf32>
    %c0_51 = arith.constant 0 : index
    %c0_52 = arith.constant 0 : index
    %190 = vector.load %arg6[%c0_51, %c0_52] : memref<8x48xf32, #tpu.memory_space<vmem>>, vector<8x32xf32>
    tpu.vector_store %arg6[%c0_51, %c0_52], %189 {strides = array<i32>} : memref<8x48xf32, #tpu.memory_space<vmem>>, vector<8x32xf32>,
    %c0_53 = arith.constant 0 : index
    %c32 = arith.constant 32 : index
    %191 = vector.load %arg6[%c0_53, %c32] : memref<8x48xf32, #tpu.memory_space<vmem>>, vector<8x16xf32>
    tpu.vector_store %arg6[%c0_53, %c32], %146 {strides = array<i32>} : memref<8x48xf32, #tpu.memory_space<vmem>>, vector<8x16xf32>,
    return
  }
  func.func @transform_0(%arg0: i32) -> (i32, i32) {
    %c0_i32 = arith.constant 0 : i32
    %c0_i32_0 = arith.constant 0 : i32
    return %arg0, %c0_i32 : i32, i32
  }
  func.func @transform_1(%arg0: i32) -> (i32, i32) {
    %c0_i32 = arith.constant 0 : i32
    %c0_i32_0 = arith.constant 0 : i32
    return %arg0, %c0_i32 : i32, i32
  }
  func.func @transform_2(%arg0: i32) -> (i32, i32) {
    %c0_i32 = arith.constant 0 : i32
    %c0_i32_0 = arith.constant 0 : i32
    %c0_i32_1 = arith.constant 0 : i32
    return %c0_i32, %c0_i32_0 : i32, i32
  }
  func.func @transform_3(%arg0: i32) -> (i32, i32) {
    %c0_i32 = arith.constant 0 : i32
    %c0_i32_0 = arith.constant 0 : i32
    %c0_i32_1 = arith.constant 0 : i32
    return %c0_i32, %c0_i32_0 : i32, i32
  }
  func.func @transform_4(%arg0: i32) -> (i32, i32) {
    %c0_i32 = arith.constant 0 : i32
    %c0_i32_0 = arith.constant 0 : i32
    %c0_i32_1 = arith.constant 0 : i32
    return %c0_i32, %c0_i32_0 : i32, i32
  }
  func.func @transform_5(%arg0: i32) -> (i32, i32) {
    %c0_i32 = arith.constant 0 : i32
    %c0_i32_0 = arith.constant 0 : i32
    return %arg0, %c0_i32 : i32, i32
  }
}

</mosaic_0001>

<llo_original>
// kernel: tpu_custom_call.1
$region0: #{tpu_custom_call.1}
  #allocation0 [shape = 'u32[]', space=smem, size = 0x4, offset = 0x4, fixed_abs, tag = 'smem constant byte address 0x4 - core index']
  #allocation1 [shape = 'u32[72,128]{1,0:T(1,128)}', space=vmem, size = 0x9000, scoped, tag = 'internal scratch']
  %s0 = inlined_call_operand.hbm [shape: f32[16,32], index: 0, kind: input, shape index: {}]
  %s1 = inlined_call_operand.hbm [shape: f32[32,32], index: 1, kind: input, shape index: {}]
  %s2 = inlined_call_operand.hbm [shape: f32[8,32], index: 2, kind: input, shape index: {}]
  %s3 = inlined_call_operand.hbm [shape: f32[32,128], index: 3, kind: input, shape index: {}]
  %s4 = inlined_call_operand.hbm [shape: f32[32,96], index: 4, kind: input, shape index: {}]
  %s5 = inlined_call_operand.hbm [shape: f32[16,48], index: 5, kind: output, shape index: {}]
  %s6 = sld [smem:[#allocation0]]
  $region73: #{tpu_custom_call.1} parent=0
    _
  %s8 = ssub.s32 1, %s6
  %s9 = scalar_select 0, %s8, %s6
  $region1: #{tpu_custom_call.1} parent=0
    #allocation2 [shape = 'u8[8192]{0}', space=vmem, size = 0x2000, scoped, tag = 'input window, operand 0']
    #allocation3 [shape = 's32[2]{0}', space=sflag, size = 0x8, scoped, tag = 'scoped memory for tpu_custom_call.1']
    #allocation4 [shape = 's32[2]{0}', space=sflag, size = 0x8, scoped, tag = 'scoped memory for tpu_custom_call.1']
    #allocation5 [shape = 'u8[16384]{0}', space=vmem, size = 0x4000, scoped, tag = 'input window, operand 1']
    #allocation6 [shape = 's32[2]{0}', space=sflag, size = 0x8, scoped, tag = 'scoped memory for tpu_custom_call.1']
    #allocation7 [shape = 'u8[4096]{0}', space=vmem, size = 0x1000, scoped, tag = 'input window, operand 2, single buffered']
    #allocation8 [shape = 'u8[16384]{0}', space=vmem, size = 0x4000, scoped, tag = 'input window, operand 3, single buffered']
    #allocation9 [shape = 's32[1]{0}', space=sflag, size = 0x4, scoped, tag = 'scoped memory for tpu_custom_call.1']
    #allocation10 [shape = 'u8[16384]{0}', space=vmem, size = 0x4000, scoped, tag = 'input window, operand 4, single buffered']
    #allocation11 [shape = 'u8[8192]{0}', space=vmem, size = 0x2000, scoped, tag = 'output window, operand 0']
    %10 = vsyncpa [#allocation3], 0
    %s11 = scalar_lea.sflag [#allocation3], 1
    %12 = vsyncpa %s11, 0
    %13 = vsyncpa [#allocation6], 0
    %s14 = scalar_lea.sflag [#allocation6], 1
    %15 = vsyncpa %s14, 0
    %16 = vsyncpa [#allocation9], 0
    %17 = vsyncpa [#allocation4], 0
    %s18 = scalar_lea.sflag [#allocation4], 1
    %19 = vsyncpa %s18, 0
    loop: start=0, step=1, limit=4
    $region2: #{tpu_custom_call.1} parent=1 // loop_pre_header
      _
    $region3: #{tpu_custom_call.1} parent=1 // loop_header
      %s21 = sphi 0, %s25
      %p22 = scmp.ge.s32.totalorder %s21, 4
      %s31 = sphi 0, %s33
      %s34 = sphi 0, %s31
      %s35 = sphi 0, %s34
      %s51 = sphi 0, %s35
      %s57 = sphi 0, %s59
      %s60 = sphi 0, %s57
      %s61 = sphi 0, %s60
      %s77 = sphi 0, %s61
      %s81 = sphi 0, %s81
      %s83 = sphi 0, %s81
      %s84 = sphi 0, %s83
      %s98 = sphi 0, %s84
      %s102 = sphi 0, %s102
      %s104 = sphi 0, %s102
      %s105 = sphi 0, %s104
      %s119 = sphi 0, %s105
      %s123 = sphi 0, %s123
      %s125 = sphi 0, %s123
      %s126 = sphi 0, %s125
      %s140 = sphi 0, %s126
      %s146 = sphi 0, %s148
      %s149 = sphi 0, %s146
      %s150 = sphi 0, %s149
      %s166 = sphi 0, %s150
    $region4: #{tpu_custom_call.1} parent=1 // loop_header_branch
      %24 = sbr.rel (%p22) target = $region8
    $region5: #{tpu_custom_call.1} parent=1 // loop_body
      %s26 = ssub.s32 %s21, 1
      %s27 = ssub.s32 %s21, 2
      %s28 = sadd.s32 %s21, 1
      %s29 = ssub.s32 %s21, %s28
      %p30 = scmp.eq.s32.totalorder %s29, 0
      %s32 = sadd.s32 %s31, 1
      %s33 = scalar_select %p30, %s31, %s32
      %p36 = pneg %p30
      %p37 = scmp.eq.s32.totalorder %s21, 1
      %p38 = por %p36, %p37
      %p39 = scmp.ne.s32.totalorder %s31, %s34
      %p40 = scmp.eq.s32.totalorder %s21, 0
      %p41 = por %p39, %p40
      %p42 = scmp.ne.s32.totalorder %s31, %s34
      %p43 = scmp.eq.s32.totalorder %s26, 1
      %p44 = por %p42, %p43
      %p45 = scmp.ne.s32.totalorder %s34, %s35
      %p46 = scmp.eq.s32.totalorder %s26, 0
      %p47 = por %p45, %p46
      %p48 = scmp.ne.s32.totalorder %s34, %s35
      %p49 = scmp.eq.s32.totalorder %s27, 1
      %p50 = por %p48, %p49
      %p52 = scmp.ne.s32.totalorder %s35, %s51
      %p53 = scmp.eq.s32.totalorder %s27, 0
      %p54 = por %p52, %p53
      %s55 = ssub.s32 %s21, %s28
      %p56 = scmp.eq.s32.totalorder %s55, 0
      %s58 = sadd.s32 %s57, 1
      %s59 = scalar_select %p56, %s57, %s58
      %p62 = pneg %p56
      %p63 = scmp.eq.s32.totalorder %s21, 1
      %p64 = por %p62, %p63
      %p65 = scmp.ne.s32.totalorder %s57, %s60
      %p66 = scmp.eq.s32.totalorder %s21, 0
      %p67 = por %p65, %p66
      %p68 = scmp.ne.s32.totalorder %s57, %s60
      %p69 = scmp.eq.s32.totalorder %s26, 1
      %p70 = por %p68, %p69
      %p71 = scmp.ne.s32.totalorder %s60, %s61
      %p72 = scmp.eq.s32.totalorder %s26, 0
      %p73 = por %p71, %p72
      %p74 = scmp.ne.s32.totalorder %s60, %s61
      %p75 = scmp.eq.s32.totalorder %s27, 1
      %p76 = por %p74, %p75
      %p78 = scmp.ne.s32.totalorder %s61, %s77
      %p79 = scmp.eq.s32.totalorder %s27, 0
      %p80 = por %p78, %p79
      %s82 = sadd.s32 %s81, 1
      %p85 = scmp.eq.s32.totalorder %s21, 1
      %p86 = scmp.ne.s32.totalorder %s81, %s83
      %p87 = scmp.eq.s32.totalorder %s21, 0
      %p88 = por %p86, %p87
      %p89 = scmp.ne.s32.totalorder %s81, %s83
      %p90 = scmp.eq.s32.totalorder %s26, 1
      %p91 = por %p89, %p90
      %p92 = scmp.ne.s32.totalorder %s83, %s84
      %p93 = scmp.eq.s32.totalorder %s26, 0
      %p94 = por %p92, %p93
      %p95 = scmp.ne.s32.totalorder %s83, %s84
      %p96 = scmp.eq.s32.totalorder %s27, 1
      %p97 = por %p95, %p96
      %p99 = scmp.ne.s32.totalorder %s84, %s98
      %p100 = scmp.eq.s32.totalorder %s27, 0
      %p101 = por %p99, %p100
      %s103 = sadd.s32 %s102, 1
      %p106 = scmp.eq.s32.totalorder %s21, 1
      %p107 = scmp.ne.s32.totalorder %s102, %s104
      %p108 = scmp.eq.s32.totalorder %s21, 0
      %p109 = por %p107, %p108
      %p110 = scmp.ne.s32.totalorder %s102, %s104
      %p111 = scmp.eq.s32.totalorder %s26, 1
      %p112 = por %p110, %p111
      %p113 = scmp.ne.s32.totalorder %s104, %s105
      %p114 = scmp.eq.s32.totalorder %s26, 0
      %p115 = por %p113, %p114
      %p116 = scmp.ne.s32.totalorder %s104, %s105
      %p117 = scmp.eq.s32.totalorder %s27, 1
      %p118 = por %p116, %p117
      %p120 = scmp.ne.s32.totalorder %s105, %s119
      %p121 = scmp.eq.s32.totalorder %s27, 0
      %p122 = por %p120, %p121
      %s124 = sadd.s32 %s123, 1
      %p127 = scmp.eq.s32.totalorder %s21, 1
      %p128 = scmp.ne.s32.totalorder %s123, %s125
      %p129 = scmp.eq.s32.totalorder %s21, 0
      %p130 = por %p128, %p129
      %p131 = scmp.ne.s32.totalorder %s123, %s125
      %p132 = scmp.eq.s32.totalorder %s26, 1
      %p133 = por %p131, %p132
      %p134 = scmp.ne.s32.totalorder %s125, %s126
      %p135 = scmp.eq.s32.totalorder %s26, 0
      %p136 = por %p134, %p135
      %p137 = scmp.ne.s32.totalorder %s125, %s126
      %p138 = scmp.eq.s32.totalorder %s27, 1
      %p139 = por %p137, %p138
      %p141 = scmp.ne.s32.totalorder %s126, %s140
      %p142 = scmp.eq.s32.totalorder %s27, 0
      %p143 = por %p141, %p142
      %s144 = ssub.s32 %s21, %s28
      %p145 = scmp.eq.s32.totalorder %s144, 0
      %s147 = sadd.s32 %s146, 1
      %s148 = scalar_select %p145, %s146, %s147
      %p151 = pneg %p145
      %p152 = scmp.eq.s32.totalorder %s21, 1
      %p153 = por %p151, %p152
      %p154 = scmp.ne.s32.totalorder %s146, %s149
      %p155 = scmp.eq.s32.totalorder %s21, 0
      %p156 = por %p154, %p155
      %p157 = scmp.ne.s32.totalorder %s146, %s149
      %p158 = scmp.eq.s32.totalorder %s26, 1
      %p159 = por %p157, %p158
      %p160 = scmp.ne.s32.totalorder %s149, %s150
      %p161 = scmp.eq.s32.totalorder %s26, 0
      %p162 = por %p160, %p161
      %p163 = scmp.ne.s32.totalorder %s149, %s150
      %p164 = scmp.eq.s32.totalorder %s27, 1
      %p165 = por %p163, %p164
      %p167 = scmp.ne.s32.totalorder %s150, %s166
      %p168 = scmp.eq.s32.totalorder %s27, 0
      %p169 = por %p167, %p168
      %p170 = scmp.le.s32.totalorder 1, %s21
      %p171 = scmp.lt.s32.totalorder %s21, 3
      %p172 = pnand %p170, %p171
      %p173 = pneg %p172
      // Predicated region
      $region9: #{tpu_custom_call.1} parent=5 // pred_check
        _
      $region10: #{tpu_custom_call.1} parent=5 // pred_check_branch
        %175 = sbr.rel (%p172) target = $region12
      $region11: #{tpu_custom_call.1} parent=5 // pred_region
        %s176 = ssub.s32 %s21, 1
        // Predicated region
        $region13: #{tpu_custom_call.1} parent=11 // pred_check
          %p177 = pneg %p94
        $region14: #{tpu_custom_call.1} parent=11 // pred_check_branch
          %179 = sbr.rel (%p177) target = $region16
        $region15: #{tpu_custom_call.1} parent=11 // pred_region
          %181 = vsyncadd [#allocation6], 0
          %s183 = sshll.u32 %s2, 4
          %s184 = int_to_ptr.hbm [resolvable:$true] %s183
          %s185 = sshll.u32 [#allocation7], 4
          %s186 = int_to_ptr.vmem [resolvable:$true] %s185
          %188 = dma.hbm_to_vmem [thread:$0]  %s184, 128, %s186, [#allocation6]
        $region16: #{tpu_custom_call.1} parent=11 // pred_fallthru
          _
        // Predicated region
        $region17: #{tpu_custom_call.1} parent=11 // pred_check
          %p189 = pneg %p115
        $region18: #{tpu_custom_call.1} parent=11 // pred_check_branch
          %191 = sbr.rel (%p189) target = $region20
        $region19: #{tpu_custom_call.1} parent=11 // pred_region
          %193 = vsyncadd [#allocation9], 0
          %s194 = sshll.u32 %s3, 4
          %s195 = int_to_ptr.hbm [resolvable:$true] %s194
          %s196 = sshll.u32 [#allocation8], 4
          %s197 = int_to_ptr.vmem [resolvable:$true] %s196
          %202 = dma.hbm_to_vmem [thread:$0]  %s195, 512, %s197, [#allocation9], 128, 128, 8
        $region20: #{tpu_custom_call.1} parent=11 // pred_fallthru
          _
        // Predicated region
        $region21: #{tpu_custom_call.1} parent=11 // pred_check
          %p203 = pneg %p136
        $region22: #{tpu_custom_call.1} parent=11 // pred_check_branch
          %205 = sbr.rel (%p203) target = $region24
        $region23: #{tpu_custom_call.1} parent=11 // pred_region
          %207 = vsyncadd [#allocation9], 0
          %s208 = sshll.u32 %s4, 4
          %s209 = int_to_ptr.hbm [resolvable:$true] %s208
          %s210 = sshll.u32 [#allocation10], 4
          %s211 = int_to_ptr.vmem [resolvable:$true] %s210
          %216 = dma.hbm_to_vmem [thread:$0]  %s209, 512, %s211, [#allocation9], 128, 128, 8
        $region24: #{tpu_custom_call.1} parent=11 // pred_fallthru
          _
      $region12: #{tpu_custom_call.1} parent=5 // pred_fallthru
        _
      %p217 = scmp.lt.s32.totalorder %s21, 2
      // Predicated region
      $region25: #{tpu_custom_call.1} parent=5 // pred_check
        %p218 = pneg %p217
      $region26: #{tpu_custom_call.1} parent=5 // pred_check_branch
        %220 = sbr.rel (%p218) target = $region28
      $region27: #{tpu_custom_call.1} parent=5 // pred_region
        // Predicated region
        $region29: #{tpu_custom_call.1} parent=27 // pred_check
          %p221 = pneg %p41
        $region30: #{tpu_custom_call.1} parent=27 // pred_check_branch
          %223 = sbr.rel (%p221) target = $region32
        $region31: #{tpu_custom_call.1} parent=27 // pred_region
          %s224 = sand.u32 %s31, 1
          %s225 = scalar_lea.sflag [#allocation3], %s224
          %s226 = sand.u32 %s31, 1
          %s227 = smul.addr %s226, 8
          %s228 = scalar_lea.vmem [#allocation2], %s227
          %230 = vsyncadd %s225, 0
          %s231 = smul.addr %s21, 8
          %s232 = scalar_lea.hbm %s0, %s231
          %s234 = sshll.u32 %s232, 4
          %s235 = int_to_ptr.hbm [resolvable:$true] %s234
          %s236 = sshll.u32 %s228, 4
          %s237 = int_to_ptr.vmem [resolvable:$true] %s236
          %239 = dma.hbm_to_vmem [thread:$0]  %s235, 128, %s237, %s225
        $region32: #{tpu_custom_call.1} parent=27 // pred_fallthru
          _
        // Predicated region
        $region33: #{tpu_custom_call.1} parent=27 // pred_check
          %p240 = pneg %p67
        $region34: #{tpu_custom_call.1} parent=27 // pred_check_branch
          %242 = sbr.rel (%p240) target = $region36
        $region35: #{tpu_custom_call.1} parent=27 // pred_region
          %s243 = sand.u32 %s21, 1
          %s244 = scalar_lea.sflag [#allocation6], %s243
          %s245 = sand.u32 %s57, 1
          %s246 = smul.addr %s245, 16
          %s247 = scalar_lea.vmem [#allocation5], %s246
          %s248 = smul.u32 2, %s21
          %250 = vsyncadd %s244, 0
          %s251 = smul.addr %s248, 8
          %s252 = scalar_lea.hbm %s1, %s251
          %s253 = sshll.u32 %s252, 4
          %s254 = int_to_ptr.hbm [resolvable:$true] %s253
          %s255 = sshll.u32 %s247, 4
          %s256 = int_to_ptr.vmem [resolvable:$true] %s255
          %261 = dma.hbm_to_vmem [thread:$0]  %s254, 256, %s256, %s244, 128, 128, 8
        $region36: #{tpu_custom_call.1} parent=27 // pred_fallthru
          _
      $region28: #{tpu_custom_call.1} parent=5 // pred_fallthru
        _
      %p262 = scmp.le.s32.totalorder 1, %s21
      %p263 = scmp.lt.s32.totalorder %s21, 3
      %p264 = pnand %p262, %p263
      %p265 = pneg %p264
      // Predicated region
      $region37: #{tpu_custom_call.1} parent=5 // pred_check
        _
      $region38: #{tpu_custom_call.1} parent=5 // pred_check_branch
        %267 = sbr.rel (%p264) target = $region40
      $region39: #{tpu_custom_call.1} parent=5 // pred_region
        %s268 = ssub.s32 %s21, 1
        %s269 = sand.u32 %s34, 1
        %s270 = scalar_lea.sflag [#allocation3], %s269
        %s271 = sand.u32 %s34, 1
        %s272 = smul.addr %s271, 8
        %s273 = scalar_lea.vmem [#allocation2], %s272
        // Predicated region
        $region41: #{tpu_custom_call.1} parent=39 // pred_check
          %p274 = pneg %p47
        $region42: #{tpu_custom_call.1} parent=39 // pred_check_branch
          %276 = sbr.rel (%p274) target = $region44
        $region43: #{tpu_custom_call.1} parent=39 // pred_region
          %278 = dma.done %s270, 128
        $region44: #{tpu_custom_call.1} parent=39 // pred_fallthru
          _
        %s279 = sand.u32 %s26, 1
        %s280 = scalar_lea.sflag [#allocation6], %s279
        %s281 = sand.u32 %s60, 1
        %s282 = smul.addr %s281, 16
        %s283 = scalar_lea.vmem [#allocation5], %s282
        // Predicated region
        $region45: #{tpu_custom_call.1} parent=39 // pred_check
          %p284 = pneg %p73
        $region46: #{tpu_custom_call.1} parent=39 // pred_check_branch
          %286 = sbr.rel (%p284) target = $region48
        $region47: #{tpu_custom_call.1} parent=39 // pred_region
          %288 = dma.done %s280, 256
        $region48: #{tpu_custom_call.1} parent=39 // pred_fallthru
          _
        // Predicated region
        $region49: #{tpu_custom_call.1} parent=39 // pred_check
          %p289 = pneg %p94
        $region50: #{tpu_custom_call.1} parent=39 // pred_check_branch
          %291 = sbr.rel (%p289) target = $region52
        $region51: #{tpu_custom_call.1} parent=39 // pred_region
          %293 = dma.done [#allocation6], 128
        $region52: #{tpu_custom_call.1} parent=39 // pred_fallthru
          _
        // Predicated region
        $region53: #{tpu_custom_call.1} parent=39 // pred_check
          %p294 = pneg %p115
        $region54: #{tpu_custom_call.1} parent=39 // pred_check_branch
          %296 = sbr.rel (%p294) target = $region56
        $region55: #{tpu_custom_call.1} parent=39 // pred_region
          %298 = dma.done [#allocation9], 512
        $region56: #{tpu_custom_call.1} parent=39 // pred_fallthru
          _
        // Predicated region
        $region57: #{tpu_custom_call.1} parent=39 // pred_check
          %p299 = pneg %p136
        $region58: #{tpu_custom_call.1} parent=39 // pred_check_branch
          %301 = sbr.rel (%p299) target = $region60
        $region59: #{tpu_custom_call.1} parent=39 // pred_region
          %303 = dma.done [#allocation9], 512
        $region60: #{tpu_custom_call.1} parent=39 // pred_fallthru
          _
        %s304 = sand.u32 %s34, 1
        %s305 = scalar_lea.sflag [#allocation3], %s304
        %s306 = sand.u32 %s34, 1
        %s307 = smul.addr %s306, 8
        %s308 = scalar_lea.vmem [#allocation2], %s307
        %p309 = pneg %p47
        %p310 = pneg %p44
        %s311 = sand.u32 %s26, 1
        %s312 = scalar_lea.sflag [#allocation6], %s311
        %s313 = sand.u32 %s60, 1
        %s314 = smul.addr %s313, 16
        %s315 = scalar_lea.vmem [#allocation5], %s314
        %p316 = pneg %p73
        %p317 = pneg %p70
        %p318 = pneg %p94
        %p319 = pneg %p91
        %p320 = pneg %p115
        %p321 = pneg %p112
        %p322 = pneg %p136
        %p323 = pneg %p133
        %p324 = pneg %p162
        %p325 = pneg %p159
        %s326 = sand.u32 %s149, 1
        %s327 = scalar_lea.sflag [#allocation4], %s326
        %s328 = sand.u32 %s149, 1
        %s329 = smul.addr %s328, 8
        %s330 = scalar_lea.vmem [#allocation11], %s329
        %s331 = smul.u32 2, %s26
        %v332 = vld [vmem:[%s283] sm:$0xff]
        %v333 = vld [vmem:[%s283 + $0x8] sm:$0xff]
        %v334 = vld [vmem:[%s273] sm:$0xff]
        %v335 = vld [vmem:[#allocation7] sm:$0x1]
        %v336 = vld [vmem:[#allocation7 + $0x1] sm:$0x1]
        %v337 = vld [vmem:[#allocation7 + $0x2] sm:$0x1]
        %v338 = vld [vmem:[#allocation7 + $0x3] sm:$0x1]
        %v339 = vld [vmem:[#allocation7 + $0x4] sm:$0x1]
        %v340 = vld [vmem:[#allocation7 + $0x5] sm:$0x1]
        %v341 = vld [vmem:[#allocation7 + $0x6] sm:$0x1]
        %v342 = vld [vmem:[#allocation7 + $0x7] sm:$0x1]
        %v343 = vld [vmem:[#allocation10] sm:$0xff]
        %v344 = vld [vmem:[#allocation10 + $0x8] sm:$0xff]
        %v345 = vld [vmem:[#allocation10 + $0x10] sm:$0xff]
        %v346 = vld [vmem:[#allocation10 + $0x18] sm:$0xff]
        %vm347 = vcmask 261120
        %v348 = vsel %vm347, %v332, 0.0
        %349 = vadd.xlane.f32.xlu0 %v348
        %v350 = vpop.xlane.xlu0 %349
        %v351 = vsel %vm347, %v333, 0.0
        %352 = vadd.xlane.f32.xlu0 %v351
        %v353 = vpop.xlane.xlu0 %352
        %v354 = vrcp.pop 32.0
        %v355 = vmul.f32 32.0, %v354
        %v356 = vsub.f32 1.0, %v355
        %v357 = vmul.f32 %v354, %v356
        %v358 = vadd.f32 %v354, %v357
        %vm359 = vweird.f32 %v354
        %v360 = vsel %vm359, %v354, %v358
        %v361 = vmul.f32 %v350, %v360
        %v362 = vmul.f32 %v353, %v360
        %v363 = vmul.f32 %v332, %v332
        %v364 = vmul.f32 %v333, %v333
        %v365 = vsel %vm347, %v363, 0.0
        %366 = vadd.xlane.f32.xlu0 %v365
        %v367 = vpop.xlane.xlu0 %366
        %v368 = vsel %vm347, %v364, 0.0
        %369 = vadd.xlane.f32.xlu0 %v368
        %v370 = vpop.xlane.xlu0 %369
        %v371 = vmul.f32 %v367, %v360
        %v372 = vmul.f32 %v370, %v360
        %v373 = vsub.f32 %v332, %v361
        %v374 = vsub.f32 %v333, %v362
        %v375 = vmul.f32 %v361, %v361
        %v376 = vmul.f32 %v362, %v362
        %v377 = vsub.f32 %v371, %v375
        %v378 = vsub.f32 %v372, %v376
        %v379 = vadd.f32 %v377, 1e-06
        %v380 = vadd.f32 %v378, 1e-06
        %v381 = vrsqrt.pop %v379
        %v382 = vmul.f32 %v381, %v379
        %v383 = vmul.f32 %v382, %v381
        %v384 = vmul.f32 0.5, %v383
        %v385 = vsub.f32 1.5, %v384
        %v386 = vmul.f32 %v381, %v385
        %vm387 = vweird.f32 %v379
        %vm388 = vweird.f32 %v381
        %vm389 = vmor %vm387, %vm388
        %v390 = vsel %vm389, %v381, %v386
        %v391 = vrsqrt.pop %v380
        %v392 = vmul.f32 %v391, %v380
        %v393 = vmul.f32 %v392, %v391
        %v394 = vmul.f32 0.5, %v393
        %v395 = vsub.f32 1.5, %v394
        %v396 = vmul.f32 %v391, %v395
        %vm397 = vweird.f32 %v380
        %vm398 = vweird.f32 %v391
        %vm399 = vmor %vm397, %vm398
        %v400 = vsel %vm399, %v391, %v396
        %v401 = vmul.f32 %v373, %v390
        %v402 = vmul.f32 %v374, %v400
        %v403 = vperm.slane %v335, 0
        %v404 = vmul.f32 %v401, %v403
        %v405 = vmul.f32 %v402, %v403
        %v406 = vperm.slane %v336, 0
        %v407 = vadd.f32 %v404, %v406
        %v408 = vadd.f32 %v405, %v406
        %v409 = vld [vmem:[#allocation8] sm:$0xff]
        %v410 = vld [vmem:[#allocation8 + $0x8] sm:$0xff]
        %v411 = vld [vmem:[#allocation8 + $0x10] sm:$0xff]
        %v412 = vld [vmem:[#allocation8 + $0x18] sm:$0xff]
        %v414 = vsel %vm347, %v407, 0
        %v417 = vsel %vm347, %v408, 0
        %419 = vmatpush.msra.mxu0 0.0
        %420 = vmatpush.msra.mxu0 0.0
        %421 = vmatpush.msra.mxu0 0.0
        %422 = vmatpush.msra.mxu0 0.0
        %423 = vmatpush.msra.mxu0 0.0
        %424 = vmatpush.msra.mxu0 0.0
        %425 = vmatpush.msra.mxu0 0.0
        %426 = vmatpush.msra.mxu0 0.0
        %427 = vmatpush.msra.mxu0 0.0
        %428 = vmatpush.msra.mxu0 0.0
        %429 = vmatpush.msra.mxu0 0.0
        %430 = vmatpush.msra.mxu0 0.0
        %431 = vmatpush.msra.mxu0 %v412
        %432 = vmatpush.msra.mxu0 %v411
        %433 = vmatpush.msra.mxu0 %v410
        %434 = vmatpush.msra.mxu0 %v409
        %435 = vmatmul.f32.gmra.mxu0 %v414
        %v436 = vpop.f32.mrf.mxu0
        %v437 = vadd.f32 0.0, %v436
        %438 = vmatmul.f32.gmra.mxu0 %v417
        %v439 = vpop.f32.mrf.mxu0
        %v440 = vadd.f32 0.0, %v439
        %441 = vdwg.mxu0
        %v442 = vsel %vm347, %v334, 0.0
        %443 = vadd.xlane.f32.xlu0 %v442
        %v444 = vpop.xlane.xlu0 %443
        %v445 = vmul.f32 %v444, %v360
        %v446 = vmul.f32 %v334, %v334
        %v447 = vsel %vm347, %v446, 0.0
        %448 = vadd.xlane.f32.xlu0 %v447
        %v449 = vpop.xlane.xlu0 %448
        %v450 = vmul.f32 %v449, %v360
        %v451 = vsub.f32 %v334, %v445
        %v452 = vmul.f32 %v445, %v445
        %v453 = vsub.f32 %v450, %v452
        %v454 = vadd.f32 %v453, 1e-06
        %v455 = vrsqrt.pop %v454
        %v456 = vmul.f32 %v455, %v454
        %v457 = vmul.f32 %v456, %v455
        %v458 = vmul.f32 0.5, %v457
        %v459 = vsub.f32 1.5, %v458
        %v460 = vmul.f32 %v455, %v459
        %vm461 = vweird.f32 %v454
        %vm462 = vweird.f32 %v455
        %vm463 = vmor %vm461, %vm462
        %v464 = vsel %vm463, %v455, %v460
        %v465 = vmul.f32 %v451, %v464
        %v466 = vperm.slane %v337, 0
        %v467 = vmul.f32 %v465, %v466
        %v468 = vperm.slane %v338, 0
        %v469 = vadd.f32 %v467, %v468
        %v471 = vsel %vm347, %v469, 0
        %v474 = vsel %vm347, %v437, 0
        %v477 = vsel %vm347, %v440, 0
        %479 = vmatpush.xpose.msra.mxu0 0.0
        %480 = vmatpush.xpose.msra.mxu0 0.0
        %481 = vmatpush.xpose.msra.mxu0 0.0
        %482 = vmatpush.xpose.msra.mxu0 0.0
        %483 = vmatpush.xpose.msra.mxu0 0.0
        %484 = vmatpush.xpose.msra.mxu0 0.0
        %485 = vmatpush.xpose.msra.mxu0 0.0
        %486 = vmatpush.xpose.msra.mxu0 0.0
        %487 = vmatpush.xpose.msra.mxu0 0.0
        %488 = vmatpush.xpose.msra.mxu0 0.0
        %489 = vmatpush.xpose.msra.mxu0 0.0
        %490 = vmatpush.xpose.msra.mxu0 0.0
        %491 = vmatpush.xpose.msra.mxu0 0.0
        %492 = vmatpush.xpose.msra.mxu0 0.0
        %493 = vmatpush.xpose.msra.mxu0 %v477
        %494 = vmatpush.xpose.msra.mxu0 %v474
        %495 = vmatmul.f32.gmra.mxu0 %v471
        %v496 = vpop.f32.mrf.mxu0
        %v497 = vadd.f32 0.0, %v496
        %498 = vdwg.mxu0
        %vm499 = vcmask 130048
        %v500 = vsel %vm499, %v497, -inf
        %v501 = vrot.slane %v500, 4
        %v502 = vmax.f32 %v500, %v501
        %v503 = vrot.slane %v502, 2
        %v504 = vmax.f32 %v502, %v503
        %v505 = vrot.slane %v504, 1
        %v506 = vmax.f32 %v504, %v505
        %v507 = vsub.f32 %v497, %v506
        %v508 = vmul.f32 %v507, 1.442695
        %v509 = vpow.pop %v508
        %v510 = vsel %vm499, %v509, 0.0
        %v511 = vrot.slane %v510, 4
        %v512 = vadd.f32 %v510, %v511
        %v513 = vrot.slane %v512, 2
        %v514 = vadd.f32 %v512, %v513
        %v515 = vrot.slane %v514, 1
        %v516 = vadd.f32 %v514, %v515
        %v517 = vrcp.pop %v516
        %v518 = vmul.f32 %v516, %v517
        %v519 = vsub.f32 1.0, %v518
        %v520 = vmul.f32 %v517, %v519
        %v521 = vadd.f32 %v517, %v520
        %vm522 = vweird.f32 %v516
        %vm523 = vweird.f32 %v517
        %vm524 = vmor %vm522, %vm523
        %v525 = vsel %vm524, %v517, %v521
        %v526 = vand.u32 2147483647, %v516
        %vm527 = vcmp.eq.f32.partialorder %v526, 8.507059e+37
        %v528 = vand.u32 %v516, 2147483648
        %v529 = vor.u32 1.1754944e-38, %v528
        %v530 = vsel %vm527, %v529, %v525
        %v531 = vmul.f32 %v509, %v530
        %v532 = vsel %vm499, %v531, 0.0
        %533 = vadd.xlane.f32.xlu0 %v532
        %v534 = vpop.xlane.xlu0 %533
        %v535 = vadd.f32 %v534, 1e-08
        %v536 = vrcp.pop %v535
        %v537 = vmul.f32 %v535, %v536
        %v538 = vsub.f32 1.0, %v537
        %v539 = vmul.f32 %v536, %v538
        %v540 = vadd.f32 %v536, %v539
        %vm541 = vweird.f32 %v535
        %vm542 = vweird.f32 %v536
        %vm543 = vmor %vm541, %vm542
        %v544 = vsel %vm543, %v536, %v540
        %v545 = vand.u32 2147483647, %v535
        %vm546 = vcmp.eq.f32.partialorder %v545, 8.507059e+37
        %v547 = vand.u32 %v535, 2147483648
        %v548 = vor.u32 1.1754944e-38, %v547
        %v549 = vsel %vm546, %v548, %v544
        %v550 = vmul.f32 %v531, %v549
        %551 = vrot.lane.b32.xlu0 %v437, 96
        %v552 = vpop.permute.xlu0 %551
        %553 = vrot.lane.b32.xlu0 %v440, 96
        %v554 = vpop.permute.xlu0 %553
        %v558 = vsel %vm499, %v550, 0
        %560 = vmatpush.msra.mxu0 0.0
        %561 = vmatpush.msra.mxu0 0.0
        %562 = vmatpush.msra.mxu0 0.0
        %563 = vmatpush.msra.mxu0 0.0
        %564 = vmatpush.msra.mxu0 0.0
        %565 = vmatpush.msra.mxu0 0.0
        %566 = vmatpush.msra.mxu0 0.0
        %567 = vmatpush.msra.mxu0 0.0
        %568 = vmatpush.msra.mxu0 0.0
        %569 = vmatpush.msra.mxu0 0.0
        %570 = vmatpush.msra.mxu0 0.0
        %571 = vmatpush.msra.mxu0 0.0
        %572 = vmatpush.msra.mxu0 0.0
        %573 = vmatpush.msra.mxu0 0.0
        %574 = vmatpush.msra.mxu0 %v554
        %575 = vmatpush.msra.mxu0 %v552
        %576 = vmatmul.f32.gmra.mxu0 %v558
        %v577 = vpop.f32.mrf.mxu0
        %v578 = vadd.f32 0.0, %v577
        %579 = vdwg.mxu0
        %v581 = vsel %vm347, %v334, 0
        %583 = vmatpush.msra.mxu0 0.0
        %584 = vmatpush.msra.mxu0 0.0
        %585 = vmatpush.msra.mxu0 0.0
        %586 = vmatpush.msra.mxu0 0.0
        %587 = vmatpush.msra.mxu0 0.0
        %588 = vmatpush.msra.mxu0 0.0
        %589 = vmatpush.msra.mxu0 0.0
        %590 = vmatpush.msra.mxu0 0.0
        %591 = vmatpush.msra.mxu0 0.0
        %592 = vmatpush.msra.mxu0 0.0
        %593 = vmatpush.msra.mxu0 0.0
        %594 = vmatpush.msra.mxu0 0.0
        %595 = vmatpush.msra.mxu0 %v346
        %596 = vmatpush.msra.mxu0 %v345
        %597 = vmatpush.msra.mxu0 %v344
        %598 = vmatpush.msra.mxu0 %v343
        %599 = vmatmul.f32.gmra.mxu0 %v581
        %v600 = vpop.f32.mrf.mxu0
        %v601 = vadd.f32 0.0, %v600
        %602 = vdwg.mxu0
        %v603 = vadd.f32 %v578, %v601
        %v604 = vperm.slane %v339, 0
        %v605 = vadd.f32 %v603, %v604
        %v606 = vxor.u32 %v605, 2147483648
        %v607 = vmul.f32 %v606, 1.442695
        %v608 = vpow.pop %v607
        %v609 = vadd.f32 %v608, 1.0
        %v610 = vrcp.pop %v609
        %v611 = vmul.f32 %v609, %v610
        %v612 = vsub.f32 1.0, %v611
        %v613 = vmul.f32 %v610, %v612
        %v614 = vadd.f32 %v610, %v613
        %vm615 = vweird.f32 %v609
        %vm616 = vweird.f32 %v610
        %vm617 = vmor %vm615, %vm616
        %v618 = vsel %vm617, %v610, %v614
        %v619 = vand.u32 2147483647, %v609
        %vm620 = vcmp.eq.f32.partialorder %v619, 8.507059e+37
        %v621 = vand.u32 %v609, 2147483648
        %v622 = vor.u32 1.1754944e-38, %v621
        %v623 = vsel %vm620, %v622, %v618
        %v624 = vmul.f32 1.0, %v623
        %v625 = vperm.slane %v340, 0
        %627 = vrot.lane.b32.xlu0 %v625, 32
        %v628 = vpop.permute.xlu0 %627
        %v630 = vadd.f32 %v603, %v628
        %v631 = vxor.u32 %v630, 2147483648
        %v632 = vmul.f32 %v631, 1.442695
        %v633 = vpow.pop %v632
        %v634 = vadd.f32 %v633, 1.0
        %v635 = vrcp.pop %v634
        %v636 = vmul.f32 %v634, %v635
        %v637 = vsub.f32 1.0, %v636
        %v638 = vmul.f32 %v635, %v637
        %v639 = vadd.f32 %v635, %v638
        %vm640 = vweird.f32 %v634
        %vm641 = vweird.f32 %v635
        %vm642 = vmor %vm640, %vm641
        %v643 = vsel %vm642, %v635, %v639
        %v644 = vand.u32 2147483647, %v634
        %vm645 = vcmp.eq.f32.partialorder %v644, 8.507059e+37
        %v646 = vand.u32 %v634, 2147483648
        %v647 = vor.u32 1.1754944e-38, %v646
        %v648 = vsel %vm645, %v647, %v643
        %v649 = vmul.f32 1.0, %v648
        %v650 = vperm.slane %v341, 0
        %652 = vrot.lane.b32.xlu0 %v650, 64
        %v653 = vpop.permute.xlu0 %652
        %v655 = vadd.f32 %v578, %v653
        %v656 = vperm.slane %v342, 0
        %658 = vrot.lane.b32.xlu0 %v656, 64
        %v659 = vpop.permute.xlu0 %658
        %v661 = vadd.f32 %v601, %v659
        %663 = vrot.lane.b32.xlu0 %v661, 64
        %v664 = vpop.permute.xlu0 %663
        %v666 = vmul.f32 %v624, %v664
        %668 = vrot.lane.b32.xlu0 %v666, 64
        %v669 = vpop.permute.xlu0 %668
        %v671 = vadd.f32 %v655, %v669
        %v672 = vtanh.pop %v671
        %v673 = vsub.f32 1.0, %v649
        %675 = vrot.lane.b32.xlu0 %v672, 96
        %v676 = vpop.permute.xlu0 %675
        %v678 = vmul.f32 %v673, %v676
        %679 = vrot.lane.b32.xlu0 %v334, 32
        %v680 = vpop.permute.xlu0 %679
        %v682 = vmul.f32 %v649, %v680
        %v683 = vadd.f32 %v678, %v682
        %685 = vrot.lane.b32.xlu0 %v683, 96
        %v686 = vpop.permute.xlu0 %685
        %v688 = vsel %vm347, %v686, 0.0
        %689 = vadd.xlane.f32.xlu0 %v688
        %v690 = vpop.xlane.xlu0 %689
        %v691 = vmul.f32 %v690, %v360
        %v692 = vmul.f32 %v683, %v683
        %694 = vrot.lane.b32.xlu0 %v692, 96
        %v695 = vpop.permute.xlu0 %694
        %v697 = vsel %vm347, %v695, 0.0
        %698 = vadd.xlane.f32.xlu0 %v697
        %v699 = vpop.xlane.xlu0 %698
        %v700 = vmul.f32 %v699, %v360
        %v701 = vsub.f32 %v683, %v691
        %v702 = vmul.f32 %v691, %v691
        %v703 = vsub.f32 %v700, %v702
        %v704 = vadd.f32 %v703, 1e-06
        %v705 = vrsqrt.pop %v704
        %v706 = vmul.f32 %v705, %v704
        %v707 = vmul.f32 %v706, %v705
        %v708 = vmul.f32 0.5, %v707
        %v709 = vsub.f32 1.5, %v708
        %v710 = vmul.f32 %v705, %v709
        %vm711 = vweird.f32 %v704
        %vm712 = vweird.f32 %v705
        %vm713 = vmor %vm711, %vm712
        %v714 = vsel %vm713, %v705, %v710
        %v715 = vmul.f32 %v701, %v714
        %717 = vrot.lane.b32.xlu0 %v466, 32
        %v718 = vpop.permute.xlu0 %717
        %v720 = vmul.f32 %v715, %v718
        %722 = vrot.lane.b32.xlu0 %v468, 32
        %v723 = vpop.permute.xlu0 %722
        %v725 = vadd.f32 %v720, %v723
        %727 = vrot.lane.b32.xlu0 %v725, 96
        %v728 = vpop.permute.xlu0 %727
        %v729 = vsel %vm347, %v728, 0
        %731 = vmatpush.xpose.msra.mxu0 0.0
        %732 = vmatpush.xpose.msra.mxu0 0.0
        %733 = vmatpush.xpose.msra.mxu0 0.0
        %734 = vmatpush.xpose.msra.mxu0 0.0
        %735 = vmatpush.xpose.msra.mxu0 0.0
        %736 = vmatpush.xpose.msra.mxu0 0.0
        %737 = vmatpush.xpose.msra.mxu0 0.0
        %738 = vmatpush.xpose.msra.mxu0 0.0
        %739 = vmatpush.xpose.msra.mxu0 0.0
        %740 = vmatpush.xpose.msra.mxu0 0.0
        %741 = vmatpush.xpose.msra.mxu0 0.0
        %742 = vmatpush.xpose.msra.mxu0 0.0
        %743 = vmatpush.xpose.msra.mxu0 0.0
        %744 = vmatpush.xpose.msra.mxu0 0.0
        %745 = vmatpush.xpose.msra.mxu0 %v477
        %746 = vmatpush.xpose.msra.mxu0 %v474
        %747 = vmatmul.f32.gmra.mxu0 %v729
        %v748 = vpop.f32.mrf.mxu0
        %v749 = vadd.f32 0.0, %v748
        %750 = vdwg.mxu0
        %v751 = vsel %vm499, %v749, -inf
        %v752 = vrot.slane %v751, 4
        %v753 = vmax.f32 %v751, %v752
        %v754 = vrot.slane %v753, 2
        %v755 = vmax.f32 %v753, %v754
        %v756 = vrot.slane %v755, 1
        %v757 = vmax.f32 %v755, %v756
        %v758 = vsub.f32 %v749, %v757
        %v759 = vmul.f32 %v758, 1.442695
        %v760 = vpow.pop %v759
        %v761 = vsel %vm499, %v760, 0.0
        %v762 = vrot.slane %v761, 4
        %v763 = vadd.f32 %v761, %v762
        %v764 = vrot.slane %v763, 2
        %v765 = vadd.f32 %v763, %v764
        %v766 = vrot.slane %v765, 1
        %v767 = vadd.f32 %v765, %v766
        %v768 = vrcp.pop %v767
        %v769 = vmul.f32 %v767, %v768
        %v770 = vsub.f32 1.0, %v769
        %v771 = vmul.f32 %v768, %v770
        %v772 = vadd.f32 %v768, %v771
        %vm773 = vweird.f32 %v767
        %vm774 = vweird.f32 %v768
        %vm775 = vmor %vm773, %vm774
        %v776 = vsel %vm775, %v768, %v772
        %v777 = vand.u32 2147483647, %v767
        %vm778 = vcmp.eq.f32.partialorder %v777, 8.507059e+37
        %v779 = vand.u32 %v767, 2147483648
        %v780 = vor.u32 1.1754944e-38, %v779
        %v781 = vsel %vm778, %v780, %v776
        %v782 = vmul.f32 %v760, %v781
        %v783 = vsel %vm499, %v782, 0.0
        %784 = vadd.xlane.f32.xlu0 %v783
        %v785 = vpop.xlane.xlu0 %784
        %v786 = vadd.f32 %v785, 1e-08
        %v787 = vrcp.pop %v786
        %v788 = vmul.f32 %v786, %v787
        %v789 = vsub.f32 1.0, %v788
        %v790 = vmul.f32 %v787, %v789
        %v791 = vadd.f32 %v787, %v790
        %vm792 = vweird.f32 %v786
        %vm793 = vweird.f32 %v787
        %vm794 = vmor %vm792, %vm793
        %v795 = vsel %vm794, %v787, %v791
        %v796 = vand.u32 2147483647, %v786
        %vm797 = vcmp.eq.f32.partialorder %v796, 8.507059e+37
        %v798 = vand.u32 %v786, 2147483648
        %v799 = vor.u32 1.1754944e-38, %v798
        %v800 = vsel %vm797, %v799, %v795
        %v801 = vmul.f32 %v782, %v800
        %v803 = vsel %vm499, %v801, 0
        %805 = vmatpush.msra.mxu0 0.0
        %806 = vmatpush.msra.mxu0 0.0
        %807 = vmatpush.msra.mxu0 0.0
        %808 = vmatpush.msra.mxu0 0.0
        %809 = vmatpush.msra.mxu0 0.0
        %810 = vmatpush.msra.mxu0 0.0
        %811 = vmatpush.msra.mxu0 0.0
        %812 = vmatpush.msra.mxu0 0.0
        %813 = vmatpush.msra.mxu0 0.0
        %814 = vmatpush.msra.mxu0 0.0
        %815 = vmatpush.msra.mxu0 0.0
        %816 = vmatpush.msra.mxu0 0.0
        %817 = vmatpush.msra.mxu0 0.0
        %818 = vmatpush.msra.mxu0 0.0
        %819 = vmatpush.msra.mxu0 %v554
        %820 = vmatpush.msra.mxu0 %v552
        %821 = vmatmul.f32.gmra.mxu0 %v803
        %v822 = vpop.f32.mrf.mxu0
        %v823 = vadd.f32 0.0, %v822
        %824 = vdwg.mxu0
        %v825 = vsel %vm347, %v686, 0
        %827 = vmatpush.msra.mxu0 0.0
        %828 = vmatpush.msra.mxu0 0.0
        %829 = vmatpush.msra.mxu0 0.0
        %830 = vmatpush.msra.mxu0 0.0
        %831 = vmatpush.msra.mxu0 0.0
        %832 = vmatpush.msra.mxu0 0.0
        %833 = vmatpush.msra.mxu0 0.0
        %834 = vmatpush.msra.mxu0 0.0
        %835 = vmatpush.msra.mxu0 0.0
        %836 = vmatpush.msra.mxu0 0.0
        %837 = vmatpush.msra.mxu0 0.0
        %838 = vmatpush.msra.mxu0 0.0
        %839 = vmatpush.msra.mxu0 %v346
        %840 = vmatpush.msra.mxu0 %v345
        %841 = vmatpush.msra.mxu0 %v344
        %842 = vmatpush.msra.mxu0 %v343
        %843 = vmatmul.f32.gmra.mxu0 %v825
        %v844 = vpop.f32.mrf.mxu0
        %v845 = vadd.f32 0.0, %v844
        %846 = vdwg.mxu0
        %v847 = vadd.f32 %v823, %v845
        %v848 = vadd.f32 %v847, %v604
        %v849 = vxor.u32 %v848, 2147483648
        %v850 = vmul.f32 %v849, 1.442695
        %v851 = vpow.pop %v850
        %v852 = vadd.f32 %v851, 1.0
        %v853 = vrcp.pop %v852
        %v854 = vmul.f32 %v852, %v853
        %v855 = vsub.f32 1.0, %v854
        %v856 = vmul.f32 %v853, %v855
        %v857 = vadd.f32 %v853, %v856
        %vm858 = vweird.f32 %v852
        %vm859 = vweird.f32 %v853
        %vm860 = vmor %vm858, %vm859
        %v861 = vsel %vm860, %v853, %v857
        %v862 = vand.u32 2147483647, %v852
        %vm863 = vcmp.eq.f32.partialorder %v862, 8.507059e+37
        %v864 = vand.u32 %v852, 2147483648
        %v865 = vor.u32 1.1754944e-38, %v864
        %v866 = vsel %vm863, %v865, %v861
        %v867 = vmul.f32 1.0, %v866
        %v868 = vadd.f32 %v847, %v628
        %v869 = vxor.u32 %v868, 2147483648
        %v870 = vmul.f32 %v869, 1.442695
        %v871 = vpow.pop %v870
        %v872 = vadd.f32 %v871, 1.0
        %v873 = vrcp.pop %v872
        %v874 = vmul.f32 %v872, %v873
        %v875 = vsub.f32 1.0, %v874
        %v876 = vmul.f32 %v873, %v875
        %v877 = vadd.f32 %v873, %v876
        %vm878 = vweird.f32 %v872
        %vm879 = vweird.f32 %v873
        %vm880 = vmor %vm878, %vm879
        %v881 = vsel %vm880, %v873, %v877
        %v882 = vand.u32 2147483647, %v872
        %vm883 = vcmp.eq.f32.partialorder %v882, 8.507059e+37
        %v884 = vand.u32 %v872, 2147483648
        %v885 = vor.u32 1.1754944e-38, %v884
        %v886 = vsel %vm883, %v885, %v881
        %v887 = vmul.f32 1.0, %v886
        %v888 = vadd.f32 %v823, %v653
        %v889 = vadd.f32 %v845, %v659
        %891 = vrot.lane.b32.xlu0 %v889, 64
        %v892 = vpop.permute.xlu0 %891
        %v894 = vmul.f32 %v867, %v892
        %896 = vrot.lane.b32.xlu0 %v894, 64
        %v897 = vpop.permute.xlu0 %896
        %v899 = vadd.f32 %v888, %v897
        %v900 = vtanh.pop %v899
        %v901 = vsub.f32 1.0, %v887
        %903 = vrot.lane.b32.xlu0 %v900, 96
        %v904 = vpop.permute.xlu0 %903
        %v906 = vmul.f32 %v901, %v904
        %v907 = vmul.f32 %v887, %v683
        %v908 = vadd.f32 %v906, %v907
        %910 = vrot.lane.b32.xlu0 %v908, 96
        %v911 = vpop.permute.xlu0 %910
        %913 = vst.msk [vmem:[%s330] sm:$0xff] %vm347, %v911
        %915 = vrot.lane.b32.xlu0 %v782, 32
        %v916 = vpop.permute.xlu0 %915
        %vm918 = vcmask 392448
        %919 = vst.msk [vmem:[%s330] sm:$0xff] %vm918, %v916
        %s920 = sand.u32 %s149, 1
        %s921 = scalar_lea.sflag [#allocation4], %s920
        %s922 = sand.u32 %s149, 1
        %s923 = smul.addr %s922, 8
        %s924 = scalar_lea.vmem [#allocation11], %s923
        // Predicated region
        $region61: #{tpu_custom_call.1} parent=39 // pred_check
          %p925 = pneg %p159
        $region62: #{tpu_custom_call.1} parent=39 // pred_check_branch
          %927 = sbr.rel (%p925) target = $region64
        $region63: #{tpu_custom_call.1} parent=39 // pred_region
          %929 = vsyncadd %s921, 0
          %s930 = smul.addr %s26, 8
          %s931 = scalar_lea.hbm %s5, %s930
          %s933 = sshll.u32 %s924, 4
          %s934 = int_to_ptr.vmem [resolvable:$true] %s933
          %s935 = sshll.u32 %s931, 4
          %s936 = int_to_ptr.hbm [resolvable:$true] %s935
          %938 = dma.vmem_to_hbm [thread:$0]  %s934, 128, %s936, %s921
        $region64: #{tpu_custom_call.1} parent=39 // pred_fallthru
          _
      $region40: #{tpu_custom_call.1} parent=5 // pred_fallthru
        _
      %p939 = scmp.le.s32.totalorder 2, %s21
      // Predicated region
      $region65: #{tpu_custom_call.1} parent=5 // pred_check
        %p940 = pneg %p939
      $region66: #{tpu_custom_call.1} parent=5 // pred_check_branch
        %942 = sbr.rel (%p940) target = $region68
      $region67: #{tpu_custom_call.1} parent=5 // pred_region
        %s943 = ssub.s32 %s21, 2
        // Predicated region
        $region69: #{tpu_custom_call.1} parent=67 // pred_check
          %p944 = pneg %p165
        $region70: #{tpu_custom_call.1} parent=67 // pred_check_branch
          %946 = sbr.rel (%p944) target = $region72
        $region71: #{tpu_custom_call.1} parent=67 // pred_region
          %s947 = sand.u32 %s150, 1
          %s948 = scalar_lea.sflag [#allocation4], %s947
          %s949 = sand.u32 %s150, 1
          %s950 = smul.addr %s949, 8
          %s951 = scalar_lea.vmem [#allocation11], %s950
          %953 = dma.done %s948, 128
        $region72: #{tpu_custom_call.1} parent=67 // pred_fallthru
          _
      $region68: #{tpu_custom_call.1} parent=5 // pred_fallthru
        _
    $region6: #{tpu_custom_call.1} parent=1 // loop_footer
      %s25 = sadd.s32 1, %s21
    $region7: #{tpu_custom_call.1} parent=1 // loop_footer_branch
      %20 = sbr.rel target = $region3
    $region8: #{tpu_custom_call.1} parent=1 // loop_exit
      _
    %954 = vsyncpa [#allocation3], 1
    %s955 = scalar_lea.sflag [#allocation3], 1
    %956 = vsyncpa %s955, 1
    %957 = vsyncpa [#allocation6], 1
    %s958 = scalar_lea.sflag [#allocation6], 1
    %959 = vsyncpa %s958, 1
    %960 = vsyncpa [#allocation9], 1
    %961 = vsyncpa [#allocation4], 1
    %s962 = scalar_lea.sflag [#allocation4], 1
    %963 = vsyncpa %s962, 1

</llo_original>
